<compile_context>
chip_gen: v6e
topology: v6e:2x2x1
jax: 0.10.0
libtpu: 0.0.40
codegen_flags: <defaults>
</compile_context>

<pallas_src>
import functools

import jax
import jax.numpy as jnp
from jax import lax
from jax.experimental import pallas as pl
from jax.experimental.pallas import tpu as pltpu


def _mlp_kernel(x_ref, w1_ref, b1_ref, w2_ref, b2_ref, w3r_ref, b3_ref, o_ref):
    """One batch tile of the fused MLP.

    x_ref : (TB, F)  streamed per grid step (auto double-buffered)
    w*/b* : parameters, VMEM-resident across all grid steps (constant index_map)
    b3_ref: (1, 1) scalar bias in SMEM
    o_ref : (1, TB)  lane-dense output row (batch mapped to lanes)
    """
    # fc1 + ReLU (MXU)
    h1 = jnp.dot(x_ref[...], w1_ref[...], preferred_element_type=jnp.float32)
    h1 = jnp.maximum(h1 + b1_ref[...], 0.0)                       # (TB, 64)
    # fc2 + ReLU (MXU)
    h2 = jnp.dot(h1, w2_ref[...], preferred_element_type=jnp.float32)
    h2 = jnp.maximum(h2 + b2_ref[...], 0.0)                       # (TB, 32)
    # fc3: (1, 32) . (TB, 32)^T -> (1, TB); output is lane-dense so the final
    # store is an unmasked, full-lane-width vst.
    out_row = lax.dot_general(
        w3r_ref[...], h2,
        dimension_numbers=(((1,), (1,)), ((), ())),
        preferred_element_type=jnp.float32)                       # (1, TB)
    o_ref[...] = (out_row + b3_ref[0, 0]).astype(o_ref.dtype)


def _round_up(n: int, m: int) -> int:
    return ((n + m - 1) // m) * m


@functools.partial(jax.jit, static_argnames=("tile_b",))
def house_price_predictor(x, params, *, tile_b: int = 1024):
    """Fused 3-layer MLP forward. x: [B, input_size] f32 -> [B, 1] f32."""
    w1, b1, w2, b2, w3, b3 = params
    B, F = x.shape

    # Batch tile: multiple of 128 (lane-dense output rows), capped at tile_b.
    # At TB=1024 the f32 x tile is 64*F/16 KiB, so double-buffering is cheap
    # and fits comfortably inside v7x's 64 MiB VMEM / 32 MiB scoped default.
    TB = min(tile_b, _round_up(B, 128))
    Bp = _round_up(B, TB)
    if Bp != B:
        x = jnp.pad(x, ((0, Bp - B), (0, 0)))
    num_tiles = Bp // TB

    w3_row = w3.reshape(1, -1)  # (1, 32): fc3 weight as a lane row

    def resident(arr):  # whole-array block, never re-DMA'd across grid steps
        return pl.BlockSpec(arr.shape, lambda i: (0, 0))

    out_rows = pl.pallas_call(
        _mlp_kernel,
        out_shape=jax.ShapeDtypeStruct((1, Bp), jnp.float32),
        grid=(num_tiles,),
        in_specs=[
            pl.BlockSpec((TB, F), lambda i: (i, 0)),            # x: streamed tiles
            resident(w1),                                       # (F, 64)
            resident(b1),                                       # (1, 64)
            resident(w2),                                       # (64, 32)
            resident(b2),                                       # (1, 32)
            resident(w3_row),                                   # (1, 32)
            pl.BlockSpec(memory_space=pltpu.MemorySpace.SMEM),  # b3 scalar
        ],
        out_specs=pl.BlockSpec((1, TB), lambda i: (0, i)),
        compiler_params=pltpu.CompilerParams(
            dimension_semantics=("parallel",),  # v7x: shard batch tiles over 2 TCs
        ),
    )(x, w1, b1, w2, b2, w3_row, b3)

    # (1, Bp) lane-dense rows -> (B, 1) column expected by the module.
    return out_rows.reshape(Bp, 1)[:B]


def init_params(key, input_size):
    """Deterministic parameter init (same shapes as the PyTorch module)."""
    k1, k2, k3, k4, k5, k6 = jax.random.split(key, 6)
    # fc1: Linear(input_size, 64); fc2: Linear(64, 32); fc3: Linear(32, 1)
    w1 = jax.random.normal(k1, (input_size, 64), jnp.float32) * 0.1
    b1 = jax.random.normal(k2, (1, 64), jnp.float32) * 0.1
    w2 = jax.random.normal(k3, (64, 32), jnp.float32) * 0.1
    b2 = jax.random.normal(k4, (1, 32), jnp.float32) * 0.1
    w3 = jax.random.normal(k5, (32, 1), jnp.float32) * 0.1
    b3 = jax.random.normal(k6, (1, 1), jnp.float32) * 0.1
    return (w1, b1, w2, b2, w3, b3)


def reference_forward(x, params):
    w1, b1, w2, b2, w3, b3 = params
    h1 = jnp.maximum(x @ w1 + b1, 0.0)
    h2 = jnp.maximum(h1 @ w2 + b2, 0.0)
    return h2 @ w3 + b3


if __name__ == "__main__":
    key = jax.random.PRNGKey(0)
    k_x, k_p = jax.random.split(key)

    batch = 8
    input_size = 16  # e.g. 16 house features
    x = jax.random.normal(k_x, (batch, input_size), jnp.float32)
    params = init_params(k_p, input_size)

    out = house_price_predictor(x, params)
    out = jax.block_until_ready(out)

    ref = reference_forward(x, params)
    assert out.shape == (batch, 1)
    assert jnp.allclose(out, ref, atol=1e-4, rtol=1e-4), float(
        jnp.max(jnp.abs(out - ref)))

    print("KERNEL_OK")
</pallas_src>

<mosaic_0001>
module attributes {stable_mosaic.version = 11 : i64} {
  func.func @_mlp_kernel(%arg0: i32, %arg1: memref<128x16xf32, #tpu.memory_space<vmem>>, %arg2: memref<16x64xf32, #tpu.memory_space<vmem>>, %arg3: memref<1x64xf32, #tpu.memory_space<vmem>>, %arg4: memref<64x32xf32, #tpu.memory_space<vmem>>, %arg5: memref<1x32xf32, #tpu.memory_space<vmem>>, %arg6: memref<1x32xf32, #tpu.memory_space<vmem>>, %arg7: memref<1x1xf32, #tpu.memory_space<smem>>, %arg8: memref<1x128xf32, #tpu.memory_space<vmem>>) attributes {dimension_semantics = [#tpu.dimension_semantics<parallel>], iteration_bounds = array<i64: 1>, scalar_prefetch = 0 : i64, scratch_operands = 0 : i64, tpu.core_type = #tpu.core_type<tc>, window_params = [{transform_indices = @transform_0, window_bounds = array<i64: 128, 16>}, {pipeline_mode = #tpu.pipeline_mode<synchronous>, transform_indices = @transform_1, window_bounds = array<i64: 16, 64>}, {pipeline_mode = #tpu.pipeline_mode<synchronous>, transform_indices = @transform_2, window_bounds = array<i64: 1, 64>}, {pipeline_mode = #tpu.pipeline_mode<synchronous>, transform_indices = @transform_3, window_bounds = array<i64: 64, 32>}, {pipeline_mode = #tpu.pipeline_mode<synchronous>, transform_indices = @transform_4, window_bounds = array<i64: 1, 32>}, {pipeline_mode = #tpu.pipeline_mode<synchronous>, transform_indices = @transform_5, window_bounds = array<i64: 1, 32>}, {transform_indices = @transform_6, window_bounds = array<i64: 1, 1>}, {transform_indices = @transform_7, window_bounds = array<i64: 1, 128>}]} {
    %c0 = arith.constant 0 : index
    %c0_0 = arith.constant 0 : index
    %0 = vector.load %arg1[%c0, %c0_0] : memref<128x16xf32, #tpu.memory_space<vmem>>, vector<128x16xf32>
    %c0_1 = arith.constant 0 : index
    %c0_2 = arith.constant 0 : index
    %1 = vector.load %arg2[%c0_1, %c0_2] : memref<16x64xf32, #tpu.memory_space<vmem>>, vector<16x64xf32>
    %cst = arith.constant dense<0.000000e+00> : vector<128x64xf32>
    %2 = tpu.matmul %0, %1, %cst {dimension_numbers = #tpu.dot_dimension_numbers<[1], [0], [0], [1], [0, 0, 1, 1], [], []>} : vector<128x16xf32>, vector<16x64xf32>, vector<128x64xf32> -> vector<128x64xf32>
    %c0_3 = arith.constant 0 : index
    %c0_4 = arith.constant 0 : index
    %3 = vector.load %arg3[%c0_3, %c0_4] : memref<1x64xf32, #tpu.memory_space<vmem>>, vector<1x64xf32>
    %4 = vector.broadcast %3 : vector<1x64xf32> to vector<128x64xf32>
    %5 = arith.addf %2, %4 : vector<128x64xf32>
    %cst_5 = arith.constant 0.000000e+00 : f32
    %6 = vector.broadcast %cst_5 : f32 to vector<128x64xf32>
    %7 = arith.maximumf %5, %6 : vector<128x64xf32>
    %c0_6 = arith.constant 0 : index
    %c0_7 = arith.constant 0 : index
    %8 = vector.load %arg4[%c0_6, %c0_7] : memref<64x32xf32, #tpu.memory_space<vmem>>, vector<64x32xf32>
    %cst_8 = arith.constant dense<0.000000e+00> : vector<128x32xf32>
    %9 = tpu.matmul %7, %8, %cst_8 {dimension_numbers = #tpu.dot_dimension_numbers<[1], [0], [0], [1], [0, 0, 1, 1], [], []>} : vector<128x64xf32>, vector<64x32xf32>, vector<128x32xf32> -> vector<128x32xf32>
    %c0_9 = arith.constant 0 : index
    %c0_10 = arith.constant 0 : index
    %10 = vector.load %arg5[%c0_9, %c0_10] : memref<1x32xf32, #tpu.memory_space<vmem>>, vector<1x32xf32>
    %11 = vector.broadcast %10 : vector<1x32xf32> to vector<128x32xf32>
    %12 = arith.addf %9, %11 : vector<128x32xf32>
    %cst_11 = arith.constant 0.000000e+00 : f32
    %13 = vector.broadcast %cst_11 : f32 to vector<128x32xf32>
    %14 = arith.maximumf %12, %13 : vector<128x32xf32>
    %c0_12 = arith.constant 0 : index
    %c0_13 = arith.constant 0 : index
    %15 = vector.load %arg6[%c0_12, %c0_13] : memref<1x32xf32, #tpu.memory_space<vmem>>, vector<1x32xf32>
    %cst_14 = arith.constant dense<0.000000e+00> : vector<1x128xf32>
    %16 = tpu.matmul %15, %14, %cst_14 {dimension_numbers = #tpu.dot_dimension_numbers<[1], [1], [0], [0], [0, 0, 1, 0], [], []>} : vector<1x32xf32>, vector<128x32xf32>, vector<1x128xf32> -> vector<1x128xf32>
    %c0_15 = arith.constant 0 : index
    %c0_16 = arith.constant 0 : index
    %17 = memref.load %arg7[%c0_15, %c0_16] : memref<1x1xf32, #tpu.memory_space<smem>>
    %18 = vector.broadcast %17 : f32 to vector<1x128xf32>
    %19 = arith.addf %16, %18 : vector<1x128xf32>
    %c0_17 = arith.constant 0 : index
    %c0_18 = arith.constant 0 : index
    %20 = vector.load %arg8[%c0_17, %c0_18] : memref<1x128xf32, #tpu.memory_space<vmem>>, vector<1x128xf32>
    tpu.vector_store %arg8[%c0_17, %c0_18], %19 {strides = array<i32>} : memref<1x128xf32, #tpu.memory_space<vmem>>, vector<1x128xf32>,
    return
  }
  func.func @transform_0(%arg0: i32) -> (i32, i32) {
    %c0_i32 = arith.constant 0 : i32
    %c0_i32_0 = arith.constant 0 : i32
    return %arg0, %c0_i32 : i32, i32
  }
  func.func @transform_1(%arg0: i32) -> (i32, i32) {
    %c0_i32 = arith.constant 0 : i32
    %c0_i32_0 = arith.constant 0 : i32
    %c0_i32_1 = arith.constant 0 : i32
    return %c0_i32, %c0_i32_0 : i32, i32
  }
  func.func @transform_2(%arg0: i32) -> (i32, i32) {
    %c0_i32 = arith.constant 0 : i32
    %c0_i32_0 = arith.constant 0 : i32
    %c0_i32_1 = arith.constant 0 : i32
    return %c0_i32, %c0_i32_0 : i32, i32
  }
  func.func @transform_3(%arg0: i32) -> (i32, i32) {
    %c0_i32 = arith.constant 0 : i32
    %c0_i32_0 = arith.constant 0 : i32
    %c0_i32_1 = arith.constant 0 : i32
    return %c0_i32, %c0_i32_0 : i32, i32
  }
  func.func @transform_4(%arg0: i32) -> (i32, i32) {
    %c0_i32 = arith.constant 0 : i32
    %c0_i32_0 = arith.constant 0 : i32
    %c0_i32_1 = arith.constant 0 : i32
    return %c0_i32, %c0_i32_0 : i32, i32
  }
  func.func @transform_5(%arg0: i32) -> (i32, i32) {
    %c0_i32 = arith.constant 0 : i32
    %c0_i32_0 = arith.constant 0 : i32
    %c0_i32_1 = arith.constant 0 : i32
    return %c0_i32, %c0_i32_0 : i32, i32
  }
  func.func @transform_6(%arg0: i32) -> (i32, i32) {
    %c0_i32 = arith.constant 0 : i32
    %c0_i32_0 = arith.constant 0 : i32
    %c0_i32_1 = arith.constant 0 : i32
    return %c0_i32, %c0_i32_0 : i32, i32
  }
  func.func @transform_7(%arg0: i32) -> (i32, i32) {
    %c0_i32 = arith.constant 0 : i32
    %c0_i32_0 = arith.constant 0 : i32
    return %c0_i32, %arg0 : i32, i32
  }
}

</mosaic_0001>

<llo_original>
// kernel: house_price_predictor.1
$region0: #{house_price_predictor.1}
  #allocation0 [shape = 'u32[]', space=smem, size = 0x4, offset = 0x4, fixed_abs, tag = 'smem constant byte address 0x4 - core index']
  #allocation1 [shape = 'u32[144,128]{1,0:T(1,128)}', space=vmem, size = 0x12000, scoped, tag = 'internal scratch']
  #allocation2 [shape = 'f32[1,1]{1,0:T(1,128)S(6)}', space=smem, size = 0x200, scoped, tag = 'scoped memory for house_price_predictor.1']
  %s0 = inlined_call_operand.vmem [shape: f32[128,16], index: 0, kind: input, shape index: {}]
  %s1 = inlined_call_operand.vmem [shape: f32[16,64], index: 1, kind: input, shape index: {}]
  %s2 = inlined_call_operand.vmem [shape: f32[1,64], index: 2, kind: input, shape index: {}]
  %s3 = inlined_call_operand.vmem [shape: f32[64,32], index: 3, kind: input, shape index: {}]
  %s4 = inlined_call_operand.vmem [shape: f32[1,32], index: 4, kind: input, shape index: {}]
  %s5 = inlined_call_operand.vmem [shape: f32[1,32], index: 5, kind: input, shape index: {}]
  %s6 = inlined_call_operand.<no memory space> [shape: f32[1,1], index: 6, kind: input, shape index: {}]
  %s7 = inlined_call_operand.vmem [shape: f32[1,128], index: 7, kind: output, shape index: {}]
  %s8 = sld [smem:[#allocation0]]
  $region38: #{house_price_predictor.1} parent=0
    _
  %s10 = ssub.s32 1, %s8
  %s11 = scalar_select 0, %s10, %s8
  %12 = sst [smem:[#allocation2]] %s6
  // Predicated region
  $region2: #{house_price_predictor.1} parent=0 // pred_check
    _
  $region3: #{house_price_predictor.1} parent=0 // pred_check_branch
    %14 = sbr.rel (0) target = $region5
  $region4: #{house_price_predictor.1} parent=0 // pred_region
    _
  $region5: #{house_price_predictor.1} parent=0 // pred_fallthru
    _
  // Predicated region
  $region6: #{house_price_predictor.1} parent=0 // pred_check
    _
  $region7: #{house_price_predictor.1} parent=0 // pred_check_branch
    %16 = sbr.rel (0) target = $region9
  $region8: #{house_price_predictor.1} parent=0 // pred_region
    _
  $region9: #{house_price_predictor.1} parent=0 // pred_fallthru
    _
  // Predicated region
  $region10: #{house_price_predictor.1} parent=0 // pred_check
    _
  $region11: #{house_price_predictor.1} parent=0 // pred_check_branch
    %18 = sbr.rel (0) target = $region13
  $region12: #{house_price_predictor.1} parent=0 // pred_region
    _
  $region13: #{house_price_predictor.1} parent=0 // pred_fallthru
    _
  // Predicated region
  $region14: #{house_price_predictor.1} parent=0 // pred_check
    _
  $region15: #{house_price_predictor.1} parent=0 // pred_check_branch
    %20 = sbr.rel (0) target = $region17
  $region16: #{house_price_predictor.1} parent=0 // pred_region
    _
  $region17: #{house_price_predictor.1} parent=0 // pred_fallthru
    _
  // Predicated region
  $region18: #{house_price_predictor.1} parent=0 // pred_check
    _
  $region19: #{house_price_predictor.1} parent=0 // pred_check_branch
    %22 = sbr.rel (0) target = $region21
  $region20: #{house_price_predictor.1} parent=0 // pred_region
    _
  $region21: #{house_price_predictor.1} parent=0 // pred_fallthru
    _
  // Predicated region
  $region22: #{house_price_predictor.1} parent=0 // pred_check
    _
  $region23: #{house_price_predictor.1} parent=0 // pred_check_branch
    %24 = sbr.rel (0) target = $region25
  $region24: #{house_price_predictor.1} parent=0 // pred_region
    _
  $region25: #{house_price_predictor.1} parent=0 // pred_fallthru
    _
  // Predicated region
  $region26: #{house_price_predictor.1} parent=0 // pred_check
    _
  $region27: #{house_price_predictor.1} parent=0 // pred_check_branch
    %26 = sbr.rel (0) target = $region29
  $region28: #{house_price_predictor.1} parent=0 // pred_region
    _
  $region29: #{house_price_predictor.1} parent=0 // pred_fallthru
    _
  %v27 = vld [vmem:[%s0] sm:$0xff]
  %v28 = vld [vmem:[%s0 + $0x8] sm:$0xff]
  %v29 = vld [vmem:[%s0 + $0x10] sm:$0xff]
  %v30 = vld [vmem:[%s0 + $0x18] sm:$0xff]
  %v31 = vld [vmem:[%s0 + $0x20] sm:$0xff]
  %v32 = vld [vmem:[%s0 + $0x28] sm:$0xff]
  %v33 = vld [vmem:[%s0 + $0x30] sm:$0xff]
  %v34 = vld [vmem:[%s0 + $0x38] sm:$0xff]
  %v35 = vld [vmem:[%s0 + $0x40] sm:$0xff]
  %v36 = vld [vmem:[%s0 + $0x48] sm:$0xff]
  %v37 = vld [vmem:[%s0 + $0x50] sm:$0xff]
  %v38 = vld [vmem:[%s0 + $0x58] sm:$0xff]
  %v39 = vld [vmem:[%s0 + $0x60] sm:$0xff]
  %v40 = vld [vmem:[%s0 + $0x68] sm:$0xff]
  %v41 = vld [vmem:[%s0 + $0x70] sm:$0xff]
  %v42 = vld [vmem:[%s0 + $0x78] sm:$0xff]
  %v43 = vld [vmem:[%s1] sm:$0xff]
  %v44 = vld [vmem:[%s1 + $0x8] sm:$0xff]
  %v45 = vld [vmem:[%s2] sm:$0x1]
  %v47 = vlaneseq
  %v48 = vshrl.u32 %v47, 7
  %v49 = vsub.s32 0, %v48
  %v50 = vrot.slane %v45, %v49
  %vm52 = vcmask 130048
  %v54 = vsel %vm52, %v27, 0
  %v57 = vsel %vm52, %v28, 0
  %v60 = vsel %vm52, %v29, 0
  %v63 = vsel %vm52, %v30, 0
  %v66 = vsel %vm52, %v31, 0
  %v69 = vsel %vm52, %v32, 0
  %v72 = vsel %vm52, %v33, 0
  %v75 = vsel %vm52, %v34, 0
  %v78 = vsel %vm52, %v35, 0
  %v81 = vsel %vm52, %v36, 0
  %v84 = vsel %vm52, %v37, 0
  %v87 = vsel %vm52, %v38, 0
  %v90 = vsel %vm52, %v39, 0
  %v93 = vsel %vm52, %v40, 0
  %v96 = vsel %vm52, %v41, 0
  %v99 = vsel %vm52, %v42, 0
  %101 = vmatprep.subr.mxu0 0.0
  %102 = vmatpush1.msra.mxu0 0.0
  %103 = vmatprep.subr.mxu0 0.0
  %104 = vmatpush1.msra.mxu0 0.0
  %105 = vmatprep.subr.mxu0 0.0
  %106 = vmatpush1.msra.mxu0 0.0
  %107 = vmatprep.subr.mxu0 0.0
  %108 = vmatpush1.msra.mxu0 0.0
  %109 = vmatprep.subr.mxu0 0.0
  %110 = vmatpush1.msra.mxu0 0.0
  %111 = vmatprep.subr.mxu0 0.0
  %112 = vmatpush1.msra.mxu0 0.0
  %113 = vmatprep.subr.mxu0 0.0
  %114 = vmatpush1.msra.mxu0 0.0
  %115 = vmatprep.subr.mxu0 0.0
  %116 = vmatpush1.msra.mxu0 0.0
  %117 = vmatprep.subr.mxu0 0.0
  %118 = vmatpush1.msra.mxu0 0.0
  %119 = vmatprep.subr.mxu0 0.0
  %120 = vmatpush1.msra.mxu0 0.0
  %121 = vmatprep.subr.mxu0 0.0
  %122 = vmatpush1.msra.mxu0 0.0
  %123 = vmatprep.subr.mxu0 0.0
  %124 = vmatpush1.msra.mxu0 0.0
  %125 = vmatprep.subr.mxu0 0.0
  %126 = vmatpush1.msra.mxu0 0.0
  %127 = vmatprep.subr.mxu0 0.0
  %128 = vmatpush1.msra.mxu0 0.0
  %129 = vmatprep.subr.mxu0 0.0
  %130 = vmatpush1.msra.mxu0 %v44
  %131 = vmatprep.subr.mxu0 0.0
  %132 = vmatpush1.msra.mxu0 %v43
  %133 = vmatprep.subr.mxu0 0.0
  %134 = vmatpush2.msra.mxu0 0.0
  %135 = vmatprep.subr.mxu0 0.0
  %136 = vmatpush2.msra.mxu0 0.0
  %137 = vmatprep.subr.mxu0 0.0
  %138 = vmatpush2.msra.mxu0 0.0
  %139 = vmatprep.subr.mxu0 0.0
  %140 = vmatpush2.msra.mxu0 0.0
  %141 = vmatprep.subr.mxu0 0.0
  %142 = vmatpush2.msra.mxu0 0.0
  %143 = vmatprep.subr.mxu0 0.0
  %144 = vmatpush2.msra.mxu0 0.0
  %145 = vmatprep.subr.mxu0 0.0
  %146 = vmatpush2.msra.mxu0 0.0
  %147 = vmatprep.subr.mxu0 0.0
  %148 = vmatpush2.msra.mxu0 0.0
  %149 = vmatprep.subr.mxu0 0.0
  %150 = vmatpush2.msra.mxu0 0.0
  %151 = vmatprep.subr.mxu0 0.0
  %152 = vmatpush2.msra.mxu0 0.0
  %153 = vmatprep.subr.mxu0 0.0
  %154 = vmatpush2.msra.mxu0 0.0
  %155 = vmatprep.subr.mxu0 0.0
  %156 = vmatpush2.msra.mxu0 0.0
  %157 = vmatprep.subr.mxu0 0.0
  %158 = vmatpush2.msra.mxu0 0.0
  %159 = vmatprep.subr.mxu0 0.0
  %160 = vmatpush2.msra.mxu0 0.0
  %161 = vmatprep.subr.mxu0 0.0
  %162 = vmatpush2.msra.mxu0 0.0
  %163 = vmatprep.subr.mxu0 0.0
  %164 = vmatpush2.msra.mxu0 0.0
  %165 = vmatprep.mubr.f32.mxu0 0.0
  %166 = vmatmul.mubr.f32.gmra.mxu0 %v54
  %v167 = vpop.f32.mrf.mxu0
  %v168 = vadd.f32 %v50, %v167
  %v169 = vpop.f32.mrf.mxu0
  %170 = vmatprep.mubr.f32.mxu0 0.0
  %171 = vmatmul.mubr.f32.gmra.mxu0 %v57
  %v172 = vpop.f32.mrf.mxu0
  %v173 = vadd.f32 %v50, %v172
  %v174 = vpop.f32.mrf.mxu0
  %175 = vmatprep.mubr.f32.mxu0 0.0
  %176 = vmatmul.mubr.f32.gmra.mxu0 %v60
  %v177 = vpop.f32.mrf.mxu0
  %v178 = vadd.f32 %v50, %v177
  %v179 = vpop.f32.mrf.mxu0
  %180 = vmatprep.mubr.f32.mxu0 0.0
  %181 = vmatmul.mubr.f32.gmra.mxu0 %v63
  %v182 = vpop.f32.mrf.mxu0
  %v183 = vadd.f32 %v50, %v182
  %v184 = vpop.f32.mrf.mxu0
  %185 = vmatprep.mubr.f32.mxu0 0.0
  %186 = vmatmul.mubr.f32.gmra.mxu0 %v66
  %v187 = vpop.f32.mrf.mxu0
  %v188 = vadd.f32 %v50, %v187
  %v189 = vpop.f32.mrf.mxu0
  %190 = vmatprep.mubr.f32.mxu0 0.0
  %191 = vmatmul.mubr.f32.gmra.mxu0 %v69
  %v192 = vpop.f32.mrf.mxu0
  %v193 = vadd.f32 %v50, %v192
  %v194 = vpop.f32.mrf.mxu0
  %195 = vmatprep.mubr.f32.mxu0 0.0
  %196 = vmatmul.mubr.f32.gmra.mxu0 %v72
  %v197 = vpop.f32.mrf.mxu0
  %v198 = vadd.f32 %v50, %v197
  %v199 = vpop.f32.mrf.mxu0
  %200 = vmatprep.mubr.f32.mxu0 0.0
  %201 = vmatmul.mubr.f32.gmra.mxu0 %v75
  %v202 = vpop.f32.mrf.mxu0
  %v203 = vadd.f32 %v50, %v202
  %v204 = vpop.f32.mrf.mxu0
  %205 = vmatprep.mubr.f32.mxu0 0.0
  %206 = vmatmul.mubr.f32.gmra.mxu0 %v78
  %v207 = vpop.f32.mrf.mxu0
  %v208 = vadd.f32 %v50, %v207
  %v209 = vpop.f32.mrf.mxu0
  %210 = vmatprep.mubr.f32.mxu0 0.0
  %211 = vmatmul.mubr.f32.gmra.mxu0 %v81
  %v212 = vpop.f32.mrf.mxu0
  %v213 = vadd.f32 %v50, %v212
  %v214 = vpop.f32.mrf.mxu0
  %215 = vmatprep.mubr.f32.mxu0 0.0
  %216 = vmatmul.mubr.f32.gmra.mxu0 %v84
  %v217 = vpop.f32.mrf.mxu0
  %v218 = vadd.f32 %v50, %v217
  %v219 = vpop.f32.mrf.mxu0
  %220 = vmatprep.mubr.f32.mxu0 0.0
  %221 = vmatmul.mubr.f32.gmra.mxu0 %v87
  %v222 = vpop.f32.mrf.mxu0
  %v223 = vadd.f32 %v50, %v222
  %v224 = vpop.f32.mrf.mxu0
  %225 = vmatprep.mubr.f32.mxu0 0.0
  %226 = vmatmul.mubr.f32.gmra.mxu0 %v90
  %v227 = vpop.f32.mrf.mxu0
  %v228 = vadd.f32 %v50, %v227
  %v229 = vpop.f32.mrf.mxu0
  %230 = vmatprep.mubr.f32.mxu0 0.0
  %231 = vmatmul.mubr.f32.gmra.mxu0 %v93
  %v232 = vpop.f32.mrf.mxu0
  %v233 = vadd.f32 %v50, %v232
  %v234 = vpop.f32.mrf.mxu0
  %235 = vmatprep.mubr.f32.mxu0 0.0
  %236 = vmatmul.mubr.f32.gmra.mxu0 %v96
  %v237 = vpop.f32.mrf.mxu0
  %v238 = vadd.f32 %v50, %v237
  %v239 = vpop.f32.mrf.mxu0
  %240 = vmatprep.mubr.f32.mxu0 0.0
  %241 = vmatmul.mubr.f32.gmra.mxu0 %v99
  %v242 = vpop.f32.mrf.mxu0
  %v243 = vadd.f32 %v50, %v242
  %v244 = vpop.f32.mrf.mxu0
  %245 = vdwg.mxu0
  %v246 = vmax.f32 %v168, 0.0
  %v247 = vmax.f32 %v173, 0.0
  %v248 = vmax.f32 %v178, 0.0
  %v249 = vmax.f32 %v183, 0.0
  %v250 = vmax.f32 %v188, 0.0
  %v251 = vmax.f32 %v193, 0.0
  %v252 = vmax.f32 %v198, 0.0
  %v253 = vmax.f32 %v203, 0.0
  %v254 = vmax.f32 %v208, 0.0
  %v255 = vmax.f32 %v213, 0.0
  %v256 = vmax.f32 %v218, 0.0
  %v257 = vmax.f32 %v223, 0.0
  %v258 = vmax.f32 %v228, 0.0
  %v259 = vmax.f32 %v233, 0.0
  %v260 = vmax.f32 %v238, 0.0
  %v261 = vmax.f32 %v243, 0.0
  %v262 = vld [vmem:[%s3] sm:$0xff]
  %v263 = vld [vmem:[%s3 + $0x8] sm:$0xff]
  %v264 = vld [vmem:[%s3 + $0x10] sm:$0xff]
  %v265 = vld [vmem:[%s3 + $0x18] sm:$0xff]
  %v266 = vld [vmem:[%s3 + $0x20] sm:$0xff]
  %v267 = vld [vmem:[%s3 + $0x28] sm:$0xff]
  %v268 = vld [vmem:[%s3 + $0x30] sm:$0xff]
  %v269 = vld [vmem:[%s3 + $0x38] sm:$0xff]
  %v270 = vld [vmem:[%s4] sm:$0x1]
  %v272 = vlaneseq
  %v273 = vshrl.u32 %v272, 7
  %v274 = vsub.s32 0, %v273
  %v275 = vrot.slane %v270, %v274
  %vm277 = vcmask 523264
  %v279 = vsel %vm277, %v246, 0
  %v282 = vsel %vm277, %v247, 0
  %v285 = vsel %vm277, %v248, 0
  %v288 = vsel %vm277, %v249, 0
  %v291 = vsel %vm277, %v250, 0
  %v294 = vsel %vm277, %v251, 0
  %v297 = vsel %vm277, %v252, 0
  %v300 = vsel %vm277, %v253, 0
  %v303 = vsel %vm277, %v254, 0
  %v306 = vsel %vm277, %v255, 0
  %v309 = vsel %vm277, %v256, 0
  %v312 = vsel %vm277, %v257, 0
  %v315 = vsel %vm277, %v258, 0
  %v318 = vsel %vm277, %v259, 0
  %v321 = vsel %vm277, %v260, 0
  %v324 = vsel %vm277, %v261, 0
  %326 = vmatprep.subr.mxu0 0.0
  %327 = vmatpush1.msra.mxu0 0.0
  %328 = vmatprep.subr.mxu0 0.0
  %329 = vmatpush1.msra.mxu0 0.0
  %330 = vmatprep.subr.mxu0 0.0
  %331 = vmatpush1.msra.mxu0 0.0
  %332 = vmatprep.subr.mxu0 0.0
  %333 = vmatpush1.msra.mxu0 0.0
  %334 = vmatprep.subr.mxu0 0.0
  %335 = vmatpush1.msra.mxu0 0.0
  %336 = vmatprep.subr.mxu0 0.0
  %337 = vmatpush1.msra.mxu0 0.0
  %338 = vmatprep.subr.mxu0 0.0
  %339 = vmatpush1.msra.mxu0 0.0
  %340 = vmatprep.subr.mxu0 0.0
  %341 = vmatpush1.msra.mxu0 0.0
  %342 = vmatprep.subr.mxu0 0.0
  %343 = vmatpush1.msra.mxu0 %v269
  %344 = vmatprep.subr.mxu0 0.0
  %345 = vmatpush1.msra.mxu0 %v268
  %346 = vmatprep.subr.mxu0 0.0
  %347 = vmatpush1.msra.mxu0 %v267
  %348 = vmatprep.subr.mxu0 0.0
  %349 = vmatpush1.msra.mxu0 %v266
  %350 = vmatprep.subr.mxu0 0.0
  %351 = vmatpush1.msra.mxu0 %v265
  %352 = vmatprep.subr.mxu0 0.0
  %353 = vmatpush1.msra.mxu0 %v264
  %354 = vmatprep.subr.mxu0 0.0
  %355 = vmatpush1.msra.mxu0 %v263
  %356 = vmatprep.subr.mxu0 0.0
  %357 = vmatpush1.msra.mxu0 %v262
  %358 = vmatprep.subr.mxu0 0.0
  %359 = vmatpush2.msra.mxu0 0.0
  %360 = vmatprep.subr.mxu0 0.0
  %361 = vmatpush2.msra.mxu0 0.0
  %362 = vmatprep.subr.mxu0 0.0
  %363 = vmatpush2.msra.mxu0 0.0
  %364 = vmatprep.subr.mxu0 0.0
  %365 = vmatpush2.msra.mxu0 0.0
  %366 = vmatprep.subr.mxu0 0.0
  %367 = vmatpush2.msra.mxu0 0.0
  %368 = vmatprep.subr.mxu0 0.0
  %369 = vmatpush2.msra.mxu0 0.0
  %370 = vmatprep.subr.mxu0 0.0
  %371 = vmatpush2.msra.mxu0 0.0
  %372 = vmatprep.subr.mxu0 0.0
  %373 = vmatpush2.msra.mxu0 0.0
  %374 = vmatprep.subr.mxu0 0.0
  %375 = vmatpush2.msra.mxu0 0.0
  %376 = vmatprep.subr.mxu0 0.0
  %377 = vmatpush2.msra.mxu0 0.0
  %378 = vmatprep.subr.mxu0 0.0
  %379 = vmatpush2.msra.mxu0 0.0
  %380 = vmatprep.subr.mxu0 0.0
  %381 = vmatpush2.msra.mxu0 0.0
  %382 = vmatprep.subr.mxu0 0.0
  %383 = vmatpush2.msra.mxu0 0.0
  %384 = vmatprep.subr.mxu0 0.0
  %385 = vmatpush2.msra.mxu0 0.0
  %386 = vmatprep.subr.mxu0 0.0
  %387 = vmatpush2.msra.mxu0 0.0
  %388 = vmatprep.subr.mxu0 0.0
  %389 = vmatpush2.msra.mxu0 0.0
  %390 = vmatprep.mubr.f32.mxu0 0.0
  %391 = vmatmul.mubr.f32.gmra.mxu0 %v279
  %v392 = vpop.f32.mrf.mxu0
  %v393 = vadd.f32 %v275, %v392
  %v394 = vpop.f32.mrf.mxu0
  %395 = vmatprep.mubr.f32.mxu0 0.0
  %396 = vmatmul.mubr.f32.gmra.mxu0 %v282
  %v397 = vpop.f32.mrf.mxu0
  %v398 = vadd.f32 %v275, %v397
  %v399 = vpop.f32.mrf.mxu0
  %400 = vmatprep.mubr.f32.mxu0 0.0
  %401 = vmatmul.mubr.f32.gmra.mxu0 %v285
  %v402 = vpop.f32.mrf.mxu0
  %v403 = vadd.f32 %v275, %v402
  %v404 = vpop.f32.mrf.mxu0
  %405 = vmatprep.mubr.f32.mxu0 0.0
  %406 = vmatmul.mubr.f32.gmra.mxu0 %v288
  %v407 = vpop.f32.mrf.mxu0
  %v408 = vadd.f32 %v275, %v407
  %v409 = vpop.f32.mrf.mxu0
  %410 = vmatprep.mubr.f32.mxu0 0.0
  %411 = vmatmul.mubr.f32.gmra.mxu0 %v291
  %v412 = vpop.f32.mrf.mxu0
  %v413 = vadd.f32 %v275, %v412
  %v414 = vpop.f32.mrf.mxu0
  %415 = vmatprep.mubr.f32.mxu0 0.0
  %416 = vmatmul.mubr.f32.gmra.mxu0 %v294
  %v417 = vpop.f32.mrf.mxu0
  %v418 = vadd.f32 %v275, %v417
  %v419 = vpop.f32.mrf.mxu0
  %420 = vmatprep.mubr.f32.mxu0 0.0
  %421 = vmatmul.mubr.f32.gmra.mxu0 %v297
  %v422 = vpop.f32.mrf.mxu0
  %v423 = vadd.f32 %v275, %v422
  %v424 = vpop.f32.mrf.mxu0
  %425 = vmatprep.mubr.f32.mxu0 0.0
  %426 = vmatmul.mubr.f32.gmra.mxu0 %v300
  %v427 = vpop.f32.mrf.mxu0
  %v428 = vadd.f32 %v275, %v427
  %v429 = vpop.f32.mrf.mxu0
  %430 = vmatprep.mubr.f32.mxu0 0.0
  %431 = vmatmul.mubr.f32.gmra.mxu0 %v303
  %v432 = vpop.f32.mrf.mxu0
  %v433 = vadd.f32 %v275, %v432
  %v434 = vpop.f32.mrf.mxu0
  %435 = vmatprep.mubr.f32.mxu0 0.0
  %436 = vmatmul.mubr.f32.gmra.mxu0 %v306
  %v437 = vpop.f32.mrf.mxu0
  %v438 = vadd.f32 %v275, %v437
  %v439 = vpop.f32.mrf.mxu0
  %440 = vmatprep.mubr.f32.mxu0 0.0
  %441 = vmatmul.mubr.f32.gmra.mxu0 %v309
  %v442 = vpop.f32.mrf.mxu0
  %v443 = vadd.f32 %v275, %v442
  %v444 = vpop.f32.mrf.mxu0
  %445 = vmatprep.mubr.f32.mxu0 0.0
  %446 = vmatmul.mubr.f32.gmra.mxu0 %v312
  %v447 = vpop.f32.mrf.mxu0
  %v448 = vadd.f32 %v275, %v447
  %v449 = vpop.f32.mrf.mxu0
  %450 = vmatprep.mubr.f32.mxu0 0.0
  %451 = vmatmul.mubr.f32.gmra.mxu0 %v315
  %v452 = vpop.f32.mrf.mxu0
  %v453 = vadd.f32 %v275, %v452
  %v454 = vpop.f32.mrf.mxu0
  %455 = vmatprep.mubr.f32.mxu0 0.0
  %456 = vmatmul.mubr.f32.gmra.mxu0 %v318
  %v457 = vpop.f32.mrf.mxu0
  %v458 = vadd.f32 %v275, %v457
  %v459 = vpop.f32.mrf.mxu0
  %460 = vmatprep.mubr.f32.mxu0 0.0
  %461 = vmatmul.mubr.f32.gmra.mxu0 %v321
  %v462 = vpop.f32.mrf.mxu0
  %v463 = vadd.f32 %v275, %v462
  %v464 = vpop.f32.mrf.mxu0
  %465 = vmatprep.mubr.f32.mxu0 0.0
  %466 = vmatmul.mubr.f32.gmra.mxu0 %v324
  %v467 = vpop.f32.mrf.mxu0
  %v468 = vadd.f32 %v275, %v467
  %v469 = vpop.f32.mrf.mxu0
  %470 = vdwg.mxu0
  %v471 = vmax.f32 %v393, 0.0
  %v472 = vmax.f32 %v398, 0.0
  %v473 = vmax.f32 %v403, 0.0
  %v474 = vmax.f32 %v408, 0.0
  %v475 = vmax.f32 %v413, 0.0
  %v476 = vmax.f32 %v418, 0.0
  %v477 = vmax.f32 %v423, 0.0
  %v478 = vmax.f32 %v428, 0.0
  %v479 = vmax.f32 %v433, 0.0
  %v480 = vmax.f32 %v438, 0.0
  %v481 = vmax.f32 %v443, 0.0
  %v482 = vmax.f32 %v448, 0.0
  %v483 = vmax.f32 %v453, 0.0
  %v484 = vmax.f32 %v458, 0.0
  %v485 = vmax.f32 %v463, 0.0
  %v486 = vmax.f32 %v468, 0.0
  %v487 = vld [vmem:[%s5] sm:$0x1]
  %s488 = sld [smem:[#allocation2]]
  %v489 = vstv %s488
  %vm490 = vcmask 261120
  %v492 = vsel %vm490, %v487, 0
  %v495 = vsel %vm490, %v471, 0
  %v498 = vsel %vm490, %v472, 0
  %v501 = vsel %vm490, %v473, 0
  %v504 = vsel %vm490, %v474, 0
  %v507 = vsel %vm490, %v475, 0
  %v510 = vsel %vm490, %v476, 0
  %v513 = vsel %vm490, %v477, 0
  %v516 = vsel %vm490, %v478, 0
  %v519 = vsel %vm490, %v479, 0
  %v522 = vsel %vm490, %v480, 0
  %v525 = vsel %vm490, %v481, 0
  %v528 = vsel %vm490, %v482, 0
  %v531 = vsel %vm490, %v483, 0
  %v534 = vsel %vm490, %v484, 0
  %v537 = vsel %vm490, %v485, 0
  %v540 = vsel %vm490, %v486, 0
  %542 = vmatprep.subr.mxu0 0.0
  %543 = vmatpush1.xpose.msra.mxu0 %v540
  %544 = vmatprep.subr.mxu0 0.0
  %545 = vmatpush1.xpose.msra.mxu0 %v537
  %546 = vmatprep.subr.mxu0 0.0
  %547 = vmatpush1.xpose.msra.mxu0 %v534
  %548 = vmatprep.subr.mxu0 0.0
  %549 = vmatpush1.xpose.msra.mxu0 %v531
  %550 = vmatprep.subr.mxu0 0.0
  %551 = vmatpush1.xpose.msra.mxu0 %v528
  %552 = vmatprep.subr.mxu0 0.0
  %553 = vmatpush1.xpose.msra.mxu0 %v525
  %554 = vmatprep.subr.mxu0 0.0
  %555 = vmatpush1.xpose.msra.mxu0 %v522
  %556 = vmatprep.subr.mxu0 0.0
  %557 = vmatpush1.xpose.msra.mxu0 %v519
  %558 = vmatprep.subr.mxu0 0.0
  %559 = vmatpush1.xpose.msra.mxu0 %v516
  %560 = vmatprep.subr.mxu0 0.0
  %561 = vmatpush1.xpose.msra.mxu0 %v513
  %562 = vmatprep.subr.mxu0 0.0
  %563 = vmatpush1.xpose.msra.mxu0 %v510
  %564 = vmatprep.subr.mxu0 0.0
  %565 = vmatpush1.xpose.msra.mxu0 %v507
  %566 = vmatprep.subr.mxu0 0.0
  %567 = vmatpush1.xpose.msra.mxu0 %v504
  %568 = vmatprep.subr.mxu0 0.0
  %569 = vmatpush1.xpose.msra.mxu0 %v501
  %570 = vmatprep.subr.mxu0 0.0
  %571 = vmatpush1.xpose.msra.mxu0 %v498
  %572 = vmatprep.subr.mxu0 0.0
  %573 = vmatpush1.xpose.msra.mxu0 %v495
  %574 = vmatprep.subr.mxu0 0.0
  %575 = vmatpush2.xpose.msra.mxu0 0.0
  %576 = vmatprep.subr.mxu0 0.0
  %577 = vmatpush2.xpose.msra.mxu0 0.0
  %578 = vmatprep.subr.mxu0 0.0
  %579 = vmatpush2.xpose.msra.mxu0 0.0
  %580 = vmatprep.subr.mxu0 0.0
  %581 = vmatpush2.xpose.msra.mxu0 0.0
  %582 = vmatprep.subr.mxu0 0.0
  %583 = vmatpush2.xpose.msra.mxu0 0.0
  %584 = vmatprep.subr.mxu0 0.0
  %585 = vmatpush2.xpose.msra.mxu0 0.0
  %586 = vmatprep.subr.mxu0 0.0
  %587 = vmatpush2.xpose.msra.mxu0 0.0
  %588 = vmatprep.subr.mxu0 0.0
  %589 = vmatpush2.xpose.msra.mxu0 0.0
  %590 = vmatprep.subr.mxu0 0.0
  %591 = vmatpush2.xpose.msra.mxu0 0.0
  %592 = vmatprep.subr.mxu0 0.0
  %593 = vmatpush2.xpose.msra.mxu0 0.0
  %594 = vmatprep.subr.mxu0 0.0
  %595 = vmatpush2.xpose.msra.mxu0 0.0
  %596 = vmatprep.subr.mxu0 0.0
  %597 = vmatpush2.xpose.msra.mxu0 0.0
  %598 = vmatprep.subr.mxu0 0.0
  %599 = vmatpush2.xpose.msra.mxu0 0.0
  %600 = vmatprep.subr.mxu0 0.0
  %601 = vmatpush2.xpose.msra.mxu0 0.0
  %602 = vmatprep.subr.mxu0 0.0
  %603 = vmatpush2.xpose.msra.mxu0 0.0
  %604 = vmatprep.subr.mxu0 0.0
  %605 = vmatpush2.xpose.msra.mxu0 0.0
  %606 = vmatprep.mubr.f32.mxu0 0.0
  %607 = vmatmul.mubr.f32.gmra.mxu0 %v492
  %v608 = vpop.f32.mrf.mxu0
  %v609 = vadd.f32 %v489, %v608
  %v610 = vpop.f32.mrf.mxu0
  %611 = vdwg.mxu0
  %612 = vst [vmem:[%s7] sm:$0x1] %v609
  // Predicated region
  $region30: #{house_price_predictor.1} parent=0 // pred_check
    _
  $region31: #{house_price_predictor.1} parent=0 // pred_check_branch
    %614 = sbr.rel (0) target = $region33
  $region32: #{house_price_predictor.1} parent=0 // pred_region
    _
  $region33: #{house_price_predictor.1} parent=0 // pred_fallthru
    _
  // Predicated region
  $region34: #{house_price_predictor.1} parent=0 // pred_check
    _
  $region35: #{house_price_predictor.1} parent=0 // pred_check_branch
    %616 = sbr.rel (0) target = $region37
  $region36: #{house_price_predictor.1} parent=0 // pred_region
    _
  $region37: #{house_price_predictor.1} parent=0 // pred_fallthru
    _

</llo_original>
